<compile_context>
chip_gen: v7x
topology: tpu7x:2x2x1
jax: 0.10.0
libtpu: 0.0.40
codegen_flags: <defaults>
</compile_context>

<pallas_src>
import functools

import jax
import jax.numpy as jnp
from jax.experimental import pallas as pl
from jax.experimental.pallas import tpu as pltpu


# ----------------------------------------------------------------------------
# Kernel 1: fused 3x3 / stride-2 / pad-1 conv + bias + SiLU (in-kernel im2col)
# ----------------------------------------------------------------------------
def _conv3x3s2_silu_kernel(x0_ref, x1_ref, w_ref, bias_ref, o_ref):
    """One output row per grid step.

    The input is the space-to-depth tensor (B, Ho+1, Wo+1, 4*Cin) (zero-padded
    by one superpixel at the top/left).  A 3x3/s2 conv is a 2x2 superpixel
    window, so the kernel accumulates 4 shifted (Wo, 4Cin)@(4Cin, Cout) MXU
    matmuls; the 2-row halo is delivered by two BlockSpecs on the same array
    (rows i and i+1).  bf16 operands, f32 accumulation + epilogue (v5e-safe),
    bf16 writeback."""
    f32 = jnp.float32
    wo = o_ref.shape[2]
    cout = o_ref.shape[3]
    acc = jnp.zeros((wo, cout), f32)
    for r0, xr in enumerate((x0_ref, x1_ref)):
        for c0 in range(2):
            tap = xr[0, 0, c0:c0 + wo, :]                      # (Wo, 4*Cin) bf16
            acc = acc + jnp.dot(tap, w_ref[r0, c0],
                                preferred_element_type=f32)
    y = acc + bias_ref[...]
    y = y * jax.nn.sigmoid(y)                                  # SiLU
    o_ref[0, 0] = y.astype(o_ref.dtype)


def _space_to_depth2(x):
    """(B, H, W, C) -> (B, H//2, W//2, 4C); channel blocks ordered (pr, pc)."""
    B, H, W, C = x.shape
    x = x.reshape(B, H // 2, 2, W // 2, 2, C)
    x = x.transpose(0, 1, 3, 2, 4, 5)
    return x.reshape(B, H // 2, W // 2, 4 * C)


def conv3x3_s2_silu(x_nhwc, w_taps, bias):
    """3x3 / stride-2 / pad-1 conv + SiLU.  One space-to-depth pass in XLA,
    everything else (im2col accumulation, bias, activation) inside the kernel.
    NOTE: stages with C_out < 128 still produce partial-lane stores; the P3
    stage (C_out = 128) — whose output is re-read by the decoder — is dense."""
    B, H, W, C = x_nhwc.shape
    Ho, Wo = H // 2, W // 2
    C4 = 4 * C
    Cout = w_taps.shape[-1]
    xs = _space_to_depth2(x_nhwc.astype(jnp.bfloat16))
    xs = jnp.pad(xs, ((0, 0), (1, 0), (1, 0), (0, 0)))        # (B, Ho+1, Wo+1, 4C)
    return pl.pallas_call(
        _conv3x3s2_silu_kernel,
        out_shape=jax.ShapeDtypeStruct((B, Ho, Wo, Cout), jnp.bfloat16),
        grid=(B, Ho),
        in_specs=[
            pl.BlockSpec((1, 1, Wo + 1, C4), lambda b, i: (b, i, 0, 0)),
            pl.BlockSpec((1, 1, Wo + 1, C4), lambda b, i: (b, i + 1, 0, 0)),
            pl.BlockSpec((2, 2, C4, Cout), lambda b, i: (0, 0, 0, 0)),
            pl.BlockSpec((1, Cout), lambda b, i: (0, 0)),
        ],
        out_specs=pl.BlockSpec((1, 1, Wo, Cout), lambda b, i: (b, i, 0, 0)),
        compiler_params=pltpu.CompilerParams(
            dimension_semantics=("parallel", "parallel"),
            vmem_limit_bytes=32 * 1024 * 1024),
    )(xs, xs, w_taps, bias.reshape(1, Cout).astype(jnp.float32))


# ----------------------------------------------------------------------------
# Kernel 2: fused matmul + bias + activation (detect head)
# ----------------------------------------------------------------------------
def _mm_bias_act_kernel(x_ref, w_ref, b_ref, o_ref, *, act):
    y = jnp.dot(x_ref[...], w_ref[...], preferred_element_type=jnp.float32)
    y = y + b_ref[...]
    if act == "silu":
        y = y * jax.nn.sigmoid(y)
    elif act == "relu":
        y = jnp.maximum(y, 0.0)
    elif act == "sigmoid":
        y = jax.nn.sigmoid(y)
    o_ref[...] = y.astype(o_ref.dtype)


def pallas_linear(x, w, b, act="none", out_dtype=jnp.float32):
    """y = act(x @ w + b).  N is zero-padded to a 128 multiple so the output
    store is lane-dense (sliced back in the wrapper); no M pad/slice round
    trip (pl.cdiv grid, Pallas masks the ragged tail)."""
    M, K = x.shape
    K2, N = w.shape
    assert K == K2
    Np = ((N + 127) // 128) * 128
    if Np != N:
        w = jnp.pad(w, ((0, 0), (0, Np - N)))
        b = jnp.pad(b, ((0, Np - N),))
    xb = x.astype(jnp.bfloat16)
    wb = w.astype(jnp.bfloat16)
    tm = 128 if M >= 128 else M                    # full-extent block for small M
    y = pl.pallas_call(
        functools.partial(_mm_bias_act_kernel, act=act),
        out_shape=jax.ShapeDtypeStruct((M, Np), out_dtype),
        grid=(pl.cdiv(M, tm),),
        in_specs=[
            pl.BlockSpec((tm, K), lambda i: (i, 0)),
            pl.BlockSpec((K, Np), lambda i: (0, 0)),
            pl.BlockSpec((1, Np), lambda i: (0, 0)),
        ],
        out_specs=pl.BlockSpec((tm, Np), lambda i: (i, 0)),
        compiler_params=pltpu.CompilerParams(
            dimension_semantics=("parallel",),
            vmem_limit_bytes=32 * 1024 * 1024),
    )(xb, wb, b.reshape(1, Np).astype(jnp.float32))
    return y[:, :N] if Np != N else y


# ----------------------------------------------------------------------------
# Kernel 3: fused LandmarkBranch decoder (one pallas_call, gridded over ROIs)
# ----------------------------------------------------------------------------
def _ldmk_decoder_kernel(
        ids_ref,                       # (R,) int32 scalar prefetch (ROI->image)
        tok_ref,                       # (T, C)  this ROI's image tokens (bf16)
        mask_ref,                      # (1, 1, T) validity mask (f32)
        pos_ref,                       # (T, D)  positional embedding (f32)
        q0_ref,                        # (L, D)  learned queries (f32)
        pw_ref,                        # (C, D)  token projection (bf16)
        wqkvo_ref,                     # (D, 4D) packed q|k|v|o weights (bf16)
        lng_ref,                       # (6, D)  ln1_g, ln1_b, ln2_g, ln2_b, ln3_g, ln3_b
        bsm_ref,                       # (6, D)  proj_b, bq, bk, bv, bo, ffn_b2
        w1_ref, b1_ref, w2_ref,        # FFN
        hw_ref, hb_ref,                # fused coord|prob head, padded to 128 lanes
        o_ref,                         # (1, L, 128)
        *, num_heads):
    del ids_ref                        # consumed by the index_maps only
    f32, bf16 = jnp.float32, jnp.bfloat16
    L, D = q0_ref.shape
    T = tok_ref.shape[0]
    dh = D // num_heads

    lng = lng_ref[...]
    bsm = bsm_ref[...]
    wqkvo = wqkvo_ref[...]

    def layer_norm(x, g, b):
        mu = jnp.mean(x, axis=-1, keepdims=True)
        var = jnp.mean((x - mu) ** 2, axis=-1, keepdims=True)
        return (x - mu) * jax.lax.rsqrt(var + 1e-5) * g + b

    # --- token path (bf16 MXU operands, f32 accumulation / LN) ----------------
    tok = jnp.dot(tok_ref[...], pw_ref[...], preferred_element_type=f32)
    tok = tok + bsm[0:1] + pos_ref[...]
    tok = layer_norm(tok, lng[0:1], lng[1:2])                          # (T, D)
    tok_b = tok.astype(bf16)
    k = jnp.dot(tok_b, wqkvo[:, D:2 * D], preferred_element_type=f32) + bsm[2:3]
    v = jnp.dot(tok_b, wqkvo[:, 2 * D:3 * D], preferred_element_type=f32) + bsm[3:4]

    # --- query path ------------------------------------------------------------
    q0 = q0_ref[...]                                                   # (L, D) f32
    q = jnp.dot(q0.astype(bf16), wqkvo[:, 0:D],
                preferred_element_type=f32) + bsm[1:2]

    # --- masked multi-head cross attention (heads batched on the MXU) ----------
    qh = q.astype(bf16).reshape(L, num_heads, dh).transpose(1, 0, 2)   # (H, L, dh)
    kh = k.astype(bf16).reshape(T, num_heads, dh).transpose(1, 0, 2)   # (H, T, dh)
    vh = v.astype(bf16).reshape(T, num_heads, dh).transpose(1, 0, 2)   # (H, T, dh)
    s = jnp.einsum("hld,htd->hlt", qh, kh,
                   preferred_element_type=f32) * (1.0 / float(dh) ** 0.5)
    valid = mask_ref[...] > 0.5                                        # (1, 1, T)
    # -1e6 sentinel in f32: an all-empty ROI mask degenerates to a uniform
    # softmax over this image's tokens (matches the reference masked softmax).
    s = jnp.where(valid, s, -1e6)
    s = s - jnp.max(s, axis=-1, keepdims=True)
    p = jnp.exp(s)
    p = p * pl.reciprocal(jnp.sum(p, axis=-1, keepdims=True), approx=True)
    ctx = jnp.einsum("hlt,htd->hld", p.astype(bf16), vh,
                     preferred_element_type=f32)                       # (H, L, dh)
    ctx = ctx.transpose(1, 0, 2).reshape(L, D)
    attn = jnp.dot(ctx.astype(bf16), wqkvo[:, 3 * D:4 * D],
                   preferred_element_type=f32) + bsm[4:5]

    # --- residual / FFN / fused coord|prob head --------------------------------
    x = layer_norm(q0 + attn, lng[2:3], lng[3:4])
    h = jnp.maximum(jnp.dot(x.astype(bf16), w1_ref[...],
                            preferred_element_type=f32) + b1_ref[...], 0.0)
    x = layer_norm(x + jnp.dot(h.astype(bf16), w2_ref[...],
                               preferred_element_type=f32) + bsm[5:6],
                   lng[4:5], lng[5:6])
    out = jnp.dot(x.astype(bf16), hw_ref[...],
                  preferred_element_type=f32) + hb_ref[...]            # (L, 128)
    o_ref[0] = jax.nn.sigmoid(out).astype(o_ref.dtype)


# ----------------------------------------------------------------------------
# Glue ops (plain JAX)
# ----------------------------------------------------------------------------
def build_roi_masks(Hf, Wf, bboxes_n):
    """FeatureMapDistribution stand-in: per detection, mark P3 cells whose
    center lies inside the (normalized) bbox.  Returns (B*R_per, Hf*Wf)."""
    B, R_per, _ = bboxes_n.shape
    ys = (jnp.arange(Hf, dtype=jnp.float32) + 0.5) / Hf
    xs = (jnp.arange(Wf, dtype=jnp.float32) + 0.5) / Wf
    yy, xx = jnp.meshgrid(ys, xs, indexing="ij")                  # (Hf, Wf)
    x1, y1, x2, y2 = (bboxes_n[..., i] for i in range(4))         # (B, R_per)
    inside = ((xx[None, None] >= x1[..., None, None]) &
              (xx[None, None] <= x2[..., None, None]) &
              (yy[None, None] >= y1[..., None, None]) &
              (yy[None, None] <= y2[..., None, None]))
    return inside.reshape(B * R_per, Hf * Wf).astype(jnp.float32)


# ----------------------------------------------------------------------------
# OLDT model (synthetic deterministic parameters)
# ----------------------------------------------------------------------------
class OLDTPallas:
    C1, C2, C3 = 32, 64, 128           # backbone channels (P3 channels = 128, lane dense)
    NUM_DET = 2                        # detections per image (stub)
    NUM_LANDMARKS = 8                  # landmark queries
    D = 32                             # transformer dim
    HEADS = 4
    FFN = 64
    T = 16                             # P3 ROI tokens (4x4 for a 32x32 input)

    def __init__(self, key, landmark_branch_classes=(0,)):
        self.landmark_branch_classes = list(landmark_branch_classes)
        keys = iter(jax.random.split(key, 64))

        def init(shape, scale=0.1):
            return scale * jax.random.normal(next(keys), shape, dtype=jnp.float32)

        def pack_conv(cin, cout):
            """3x3 conv weight -> (2, 2, 4*cin, cout) superpixel-tap weights."""
            w3 = init((3, 3, cin, cout))
            bias = init((cout,))
            wt = jnp.zeros((2, 2, 4 * cin, cout), jnp.float32)
            for r0 in range(2):
                for c0 in range(2):
                    for pr in range(2):
                        for pc in range(2):
                            dy, dx = 2 * r0 + pr - 1, 2 * c0 + pc - 1
                            if 0 <= dy < 3 and 0 <= dx < 3:
                                blk = pr * 2 + pc
                                wt = wt.at[r0, c0,
                                           blk * cin:(blk + 1) * cin, :].set(w3[dy, dx])
            return wt.astype(jnp.bfloat16), bias

        # --- backbone stand-in (Conv 3x3 s2 + SiLU stages) --------------------
        self.w1t, self.b1 = pack_conv(3, self.C1)
        self.w2t, self.b2 = pack_conv(self.C1, self.C2)
        self.w3t, self.b3 = pack_conv(self.C2, self.C3)

        # --- detection head stub (boxes from pooled P3) -----------------------
        self.det_w = init((self.C3, self.NUM_DET * 4))
        self.det_b = init((self.NUM_DET * 4,))

        # --- landmark branches (one DETR-style decoder block per class) -------
        D, F, C, T, L = self.D, self.FFN, self.C3, self.T, self.NUM_LANDMARKS
        self.branches = {}
        for cid in self.landmark_branch_classes:
            proj_w, proj_b = init((C, D)), init((D,))
            pos = init((T, D))
            queries = init((L, D))
            wq, wk, wv, wo = init((D, D)), init((D, D)), init((D, D)), init((D, D))
            bq, bk, bv, bo = init((D,)), init((D,)), init((D,)), init((D,))
            ln_rows = [jnp.ones((D,)), jnp.zeros((D,)),
                       jnp.ones((D,)), jnp.zeros((D,)),
                       jnp.ones((D,)), jnp.zeros((D,))]
            ffn_w1, ffn_b1 = init((D, F)), init((F,))
            ffn_w2, ffn_b2 = init((F, D)), init((D,))
            coord_w, coord_b = init((D, 2)), init((2,))
            prob_w, prob_b = init((D, 1)), init((1,))
            # fused coord|prob head, zero-padded to 128 lanes (lane-dense store)
            head_w = jnp.pad(jnp.concatenate([coord_w, prob_w], axis=1),
                             ((0, 0), (0, 128 - 3)))
            head_b = jnp.pad(jnp.concatenate([coord_b, prob_b]), ((0, 128 - 3),))
            # packed parameter operands for the fused decoder kernel
            kargs = (
                pos,                                                   # (T, D) f32
                queries,                                               # (L, D) f32
                proj_w.astype(jnp.bfloat16),                           # (C, D)
                jnp.concatenate([wq, wk, wv, wo], 1).astype(jnp.bfloat16),  # (D, 4D)
                jnp.stack(ln_rows),                                    # (6, D)
                jnp.stack([proj_b, bq, bk, bv, bo, ffn_b2]),           # (6, D)
                ffn_w1.astype(jnp.bfloat16),
                ffn_b1.reshape(1, F),
                ffn_w2.astype(jnp.bfloat16),
                head_w.astype(jnp.bfloat16),
                head_b.reshape(1, 128),
            )
            self.branches[cid] = {"_kargs": kargs}

    # ------------------------------------------------------------------ blocks
    def backbone(self, x_nhwc):
        x = conv3x3_s2_silu(x_nhwc, self.w1t, self.b1)       # /2
        x = conv3x3_s2_silu(x, self.w2t, self.b2)            # /4
        return conv3x3_s2_silu(x, self.w3t, self.b3)         # /8  -> P3 (bf16)

    def detect_stub(self, p3):
        """Deterministic detection stand-in: NUM_DET boxes per image.
        # TODO(synk): YOLOv8 Detect head + NMS (Results objects) has no Pallas
        # equivalent; boxes are derived from pooled P3 features instead."""
        B = p3.shape[0]
        pooled = jnp.mean(p3.astype(jnp.float32), axis=(1, 2))      # (B, C3)
        det = pallas_linear(pooled, self.det_w, self.det_b, act="sigmoid")
        det = det.reshape(B, self.NUM_DET, 4)
        cx, cy = det[..., 0], det[..., 1]
        w = 0.5 + 0.5 * det[..., 2]
        h = 0.5 + 0.5 * det[..., 3]
        x1 = jnp.clip(cx - w / 2, 0.0, 1.0)
        y1 = jnp.clip(cy - h / 2, 0.0, 1.0)
        x2 = jnp.clip(cx + w / 2, 0.0, 1.0)
        y2 = jnp.clip(cy + h / 2, 0.0, 1.0)
        bboxes_n = jnp.stack([x1, y1, x2, y2], axis=-1)             # (B, R, 4)
        class_ids = jnp.zeros((B, self.NUM_DET), dtype=jnp.int32)
        return class_ids, bboxes_n

    def forward_ldmk(self, class_id, p3_tokens, masks, roi_img):
        """LandmarkBranch: fused decoder kernel, gridded over ROIs with the
        ROI->image id scalar-prefetched into the token/pos index_map."""
        p = self.branches[class_id]
        R = masks.shape[0]
        T, C, D, F, L = self.T, self.C3, self.D, self.FFN, self.NUM_LANDMARKS
        grid_spec = pltpu.PrefetchScalarGridSpec(
            num_scalar_prefetch=1,
            grid=(R,),
            in_specs=[
                pl.BlockSpec((T, C), lambda r, ids: (ids[r], 0)),     # tokens
                pl.BlockSpec((1, 1, T), lambda r, ids: (r, 0, 0)),    # mask
                pl.BlockSpec((T, D), lambda r, ids: (0, 0)),          # pos
                pl.BlockSpec((L, D), lambda r, ids: (0, 0)),          # queries
                pl.BlockSpec((C, D), lambda r, ids: (0, 0)),          # proj_w
                pl.BlockSpec((D, 4 * D), lambda r, ids: (0, 0)),      # wq|wk|wv|wo
                pl.BlockSpec((6, D), lambda r, ids: (0, 0)),          # LN g/b
                pl.BlockSpec((6, D), lambda r, ids: (0, 0)),          # biases
                pl.BlockSpec((D, F), lambda r, ids: (0, 0)),          # ffn_w1
                pl.BlockSpec((1, F), lambda r, ids: (0, 0)),          # ffn_b1
                pl.BlockSpec((F, D), lambda r, ids: (0, 0)),          # ffn_w2
                pl.BlockSpec((D, 128), lambda r, ids: (0, 0)),        # head_w
                pl.BlockSpec((1, 128), lambda r, ids: (0, 0)),        # head_b
            ],
            out_specs=pl.BlockSpec((1, L, 128), lambda r, ids: (r, 0, 0)),
        )
        out = pl.pallas_call(
            functools.partial(_ldmk_decoder_kernel, num_heads=self.HEADS),
            out_shape=jax.ShapeDtypeStruct((R, L, 128), jnp.float32),
            grid_spec=grid_spec,
            compiler_params=pltpu.CompilerParams(
                dimension_semantics=("parallel",),
                vmem_limit_bytes=32 * 1024 * 1024),
        )(roi_img, p3_tokens, masks.reshape(R, 1, T), *p["_kargs"])
        coords = out[:, :, 0:2]                                        # (R, L, 2)
        probs = out[:, :, 2]                                           # (R, L)
        return coords, probs

    # ---------------------------------------------------------------- forward
    def __call__(self, x_nchw):
        # NCHW (PyTorch) -> NHWC (kernel layout)
        x = jnp.transpose(x_nchw, (0, 2, 3, 1)).astype(jnp.float32)
        B, H, W, _ = x.shape
        input_size = jnp.tile(jnp.array([[W, H]], dtype=jnp.float32), (B, 1))

        p3 = self.backbone(x)                                 # (B, H/8, W/8, C3) bf16
        class_ids, bboxes_n = self.detect_stub(p3)            # (B, R), (B, R, 4)
        _, Hf, Wf, C = p3.shape
        assert Hf * Wf == self.T

        # One token set per image; the ROI->image assignment is a scalar-
        # prefetched id and the validity mask is a small (R, T) tensor — no
        # per-ROI P3 duplication, no dense (R*L, B*T) attention bias.
        p3_tokens = p3.reshape(B * self.T, C)                 # (B*T, C) bf16
        masks = build_roi_masks(Hf, Wf, bboxes_n)             # (B*R, T) f32
        R = self.NUM_DET
        roi_img = jnp.repeat(jnp.arange(B, dtype=jnp.int32), R)   # (B*R,)

        # gather_results stand-in: one PredResult-like dict per branch class.
        # TODO(synk): the reference groups detections per class via
        # FeatureMapDistribution's org_idx bookkeeping; with the single-class
        # detection stub every detection belongs to class 0.
        results = {}
        for cid in self.landmark_branch_classes:
            coords, probs = self.forward_ldmk(cid, p3_tokens, masks, roi_img)
            results[cid] = {
                "pred_class": jnp.full((B * R,), cid, dtype=jnp.int32),
                "pred_landmarks_coord": coords,               # (B*R, L, 2) normalized
                "pred_landmarks_probs": probs,                # (B*R, L)
                "pred_bboxes_n": bboxes_n.reshape(B * R, 4),  # (B*R, 4)
                "pred_batch_idx": roi_img,                    # (B*R,)
                "input_size": input_size[roi_img],            # (B*R, 2)
            }
        return results


# ----------------------------------------------------------------------------
if __name__ == "__main__":
    key = jax.random.PRNGKey(0)
    k_inp, k_par = jax.random.split(key)

    # small input consistent with the module's image-like input (NCHW)
    x = jax.random.normal(k_inp, (2, 3, 32, 32), dtype=jnp.float32)

    model = OLDTPallas(k_par, landmark_branch_classes=[0])
    out = model(x)
    out = jax.block_until_ready(out)

    r0 = out[0]
    assert r0["pred_landmarks_coord"].shape == (4, 8, 2)
    assert r0["pred_landmarks_probs"].shape == (4, 8)
    assert r0["pred_bboxes_n"].shape == (4, 4)
    assert bool(jnp.all(jnp.isfinite(r0["pred_landmarks_coord"])))
    assert bool(jnp.all(jnp.isfinite(r0["pred_landmarks_probs"])))
    print("KERNEL_OK")
</pallas_src>

<mosaic_0001>
module attributes {stable_mosaic.version = 11 : i64} {
  func.func @_conv3x3s2_silu_kernel(%arg0: i32, %arg1: i32, %arg2: memref<1x1x17x12xbf16, #tpu.memory_space<vmem>>, %arg3: memref<1x1x17x12xbf16, #tpu.memory_space<vmem>>, %arg4: memref<2x2x12x32xbf16, #tpu.memory_space<vmem>>, %arg5: memref<1x32xf32, #tpu.memory_space<vmem>>, %arg6: memref<1x1x16x32xbf16, #tpu.memory_space<vmem>>) attributes {dimension_semantics = [#tpu.dimension_semantics<parallel>, #tpu.dimension_semantics<parallel>], iteration_bounds = array<i64: 2, 16>, scalar_prefetch = 0 : i64, scratch_operands = 0 : i64, tpu.core_type = #tpu.core_type<tc>, window_params = [{transform_indices = @transform_0, window_bounds = array<i64: 1, 1, 17, 12>}, {transform_indices = @transform_1, window_bounds = array<i64: 1, 1, 17, 12>}, {pipeline_mode = #tpu.pipeline_mode<synchronous>, transform_indices = @transform_2, window_bounds = array<i64: 2, 2, 12, 32>}, {pipeline_mode = #tpu.pipeline_mode<synchronous>, transform_indices = @transform_3, window_bounds = array<i64: 1, 32>}, {transform_indices = @transform_4, window_bounds = array<i64: 1, 1, 16, 32>}]} {
    %cst = arith.constant 0.000000e+00 : f32
    %0 = vector.broadcast %cst : f32 to vector<16x32xf32>
    %c0 = arith.constant 0 : index
    %c0_0 = arith.constant 0 : index
    %c0_1 = arith.constant 0 : index
    %c0_2 = arith.constant 0 : index
    %1 = vector.load %arg2[%c0, %c0_0, %c0_1, %c0_2] : memref<1x1x17x12xbf16, #tpu.memory_space<vmem>>, vector<1x1x16x12xbf16>
    %2 = vector.shape_cast %1 : vector<1x1x16x12xbf16> to vector<16x12xbf16>
    %c0_3 = arith.constant 0 : index
    %c0_4 = arith.constant 0 : index
    %c0_5 = arith.constant 0 : index
    %c0_6 = arith.constant 0 : index
    %3 = vector.load %arg4[%c0_3, %c0_4, %c0_5, %c0_6] : memref<2x2x12x32xbf16, #tpu.memory_space<vmem>>, vector<1x1x12x32xbf16>
    %4 = vector.shape_cast %3 : vector<1x1x12x32xbf16> to vector<12x32xbf16>
    %cst_7 = arith.constant dense<0.000000e+00> : vector<16x32xf32>
    %5 = tpu.matmul %2, %4, %cst_7 {dimension_numbers = #tpu.dot_dimension_numbers<[1], [0], [0], [1], [0, 0, 1, 1], [], []>} : vector<16x12xbf16>, vector<12x32xbf16>, vector<16x32xf32> -> vector<16x32xf32>
    %6 = arith.addf %0, %5 : vector<16x32xf32>
    %c0_8 = arith.constant 0 : index
    %c0_9 = arith.constant 0 : index
    %c1 = arith.constant 1 : index
    %c0_10 = arith.constant 0 : index
    %7 = vector.load %arg2[%c0_8, %c0_9, %c1, %c0_10] : memref<1x1x17x12xbf16, #tpu.memory_space<vmem>>, vector<1x1x16x12xbf16>
    %8 = vector.shape_cast %7 : vector<1x1x16x12xbf16> to vector<16x12xbf16>
    %c0_11 = arith.constant 0 : index
    %c1_12 = arith.constant 1 : index
    %c0_13 = arith.constant 0 : index
    %c0_14 = arith.constant 0 : index
    %9 = vector.load %arg4[%c0_11, %c1_12, %c0_13, %c0_14] : memref<2x2x12x32xbf16, #tpu.memory_space<vmem>>, vector<1x1x12x32xbf16>
    %10 = vector.shape_cast %9 : vector<1x1x12x32xbf16> to vector<12x32xbf16>
    %cst_15 = arith.constant dense<0.000000e+00> : vector<16x32xf32>
    %11 = tpu.matmul %8, %10, %cst_15 {dimension_numbers = #tpu.dot_dimension_numbers<[1], [0], [0], [1], [0, 0, 1, 1], [], []>} : vector<16x12xbf16>, vector<12x32xbf16>, vector<16x32xf32> -> vector<16x32xf32>
    %12 = arith.addf %6, %11 : vector<16x32xf32>
    %c0_16 = arith.constant 0 : index
    %c0_17 = arith.constant 0 : index
    %c0_18 = arith.constant 0 : index
    %c0_19 = arith.constant 0 : index
    %13 = vector.load %arg3[%c0_16, %c0_17, %c0_18, %c0_19] : memref<1x1x17x12xbf16, #tpu.memory_space<vmem>>, vector<1x1x16x12xbf16>
    %14 = vector.shape_cast %13 : vector<1x1x16x12xbf16> to vector<16x12xbf16>
    %c1_20 = arith.constant 1 : index
    %c0_21 = arith.constant 0 : index
    %c0_22 = arith.constant 0 : index
    %c0_23 = arith.constant 0 : index
    %15 = vector.load %arg4[%c1_20, %c0_21, %c0_22, %c0_23] : memref<2x2x12x32xbf16, #tpu.memory_space<vmem>>, vector<1x1x12x32xbf16>
    %16 = vector.shape_cast %15 : vector<1x1x12x32xbf16> to vector<12x32xbf16>
    %cst_24 = arith.constant dense<0.000000e+00> : vector<16x32xf32>
    %17 = tpu.matmul %14, %16, %cst_24 {dimension_numbers = #tpu.dot_dimension_numbers<[1], [0], [0], [1], [0, 0, 1, 1], [], []>} : vector<16x12xbf16>, vector<12x32xbf16>, vector<16x32xf32> -> vector<16x32xf32>
    %18 = arith.addf %12, %17 : vector<16x32xf32>
    %c0_25 = arith.constant 0 : index
    %c0_26 = arith.constant 0 : index
    %c1_27 = arith.constant 1 : index
    %c0_28 = arith.constant 0 : index
    %19 = vector.load %arg3[%c0_25, %c0_26, %c1_27, %c0_28] : memref<1x1x17x12xbf16, #tpu.memory_space<vmem>>, vector<1x1x16x12xbf16>
    %20 = vector.shape_cast %19 : vector<1x1x16x12xbf16> to vector<16x12xbf16>
    %c1_29 = arith.constant 1 : index
    %c1_30 = arith.constant 1 : index
    %c0_31 = arith.constant 0 : index
    %c0_32 = arith.constant 0 : index
    %21 = vector.load %arg4[%c1_29, %c1_30, %c0_31, %c0_32] : memref<2x2x12x32xbf16, #tpu.memory_space<vmem>>, vector<1x1x12x32xbf16>
    %22 = vector.shape_cast %21 : vector<1x1x12x32xbf16> to vector<12x32xbf16>
    %cst_33 = arith.constant dense<0.000000e+00> : vector<16x32xf32>
    %23 = tpu.matmul %20, %22, %cst_33 {dimension_numbers = #tpu.dot_dimension_numbers<[1], [0], [0], [1], [0, 0, 1, 1], [], []>} : vector<16x12xbf16>, vector<12x32xbf16>, vector<16x32xf32> -> vector<16x32xf32>
    %24 = arith.addf %18, %23 : vector<16x32xf32>
    %c0_34 = arith.constant 0 : index
    %c0_35 = arith.constant 0 : index
    %25 = vector.load %arg5[%c0_34, %c0_35] : memref<1x32xf32, #tpu.memory_space<vmem>>, vector<1x32xf32>
    %26 = vector.broadcast %25 : vector<1x32xf32> to vector<16x32xf32>
    %27 = arith.addf %24, %26 : vector<16x32xf32>
    %28 = arith.negf %27 : vector<16x32xf32>
    %29 = math.exp %28 : vector<16x32xf32>
    %cst_36 = arith.constant 1.000000e+00 : f32
    %30 = vector.broadcast %cst_36 : f32 to vector<16x32xf32>
    %31 = arith.addf %30, %29 : vector<16x32xf32>
    %32 = arith.divf %30, %31 : vector<16x32xf32>
    %33 = arith.mulf %27, %32 : vector<16x32xf32>
    %34 = arith.truncf %33 : vector<16x32xf32> to vector<16x32xbf16>
    %c0_37 = arith.constant 0 : index
    %c0_38 = arith.constant 0 : index
    %c0_39 = arith.constant 0 : index
    %c0_40 = arith.constant 0 : index
    %35 = vector.load %arg6[%c0_37, %c0_38, %c0_39, %c0_40] : memref<1x1x16x32xbf16, #tpu.memory_space<vmem>>, vector<1x1x16x32xbf16>
    %36 = vector.shape_cast %35 : vector<1x1x16x32xbf16> to vector<16x32xbf16>
    %37 = vector.shape_cast %34 : vector<16x32xbf16> to vector<1x1x16x32xbf16>
    tpu.vector_store %arg6[%c0_37, %c0_38, %c0_39, %c0_40], %37 {strides = array<i32>} : memref<1x1x16x32xbf16, #tpu.memory_space<vmem>>, vector<1x1x16x32xbf16>,
    return
  }
  func.func @transform_0(%arg0: i32, %arg1: i32) -> (i32, i32, i32, i32) {
    %c0_i32 = arith.constant 0 : i32
    %c0_i32_0 = arith.constant 0 : i32
    %c0_i32_1 = arith.constant 0 : i32
    return %arg0, %arg1, %c0_i32, %c0_i32_0 : i32, i32, i32, i32
  }
  func.func @transform_1(%arg0: i32, %arg1: i32) -> (i32, i32, i32, i32) {
    %c1_i32 = arith.constant 1 : i32
    %0 = arith.addi %arg1, %c1_i32 : i32
    %c0_i32 = arith.constant 0 : i32
    %c0_i32_0 = arith.constant 0 : i32
    %c0_i32_1 = arith.constant 0 : i32
    return %arg0, %0, %c0_i32, %c0_i32_0 : i32, i32, i32, i32
  }
  func.func @transform_2(%arg0: i32, %arg1: i32) -> (i32, i32, i32, i32) {
    %c0_i32 = arith.constant 0 : i32
    %c0_i32_0 = arith.constant 0 : i32
    %c0_i32_1 = arith.constant 0 : i32
    %c0_i32_2 = arith.constant 0 : i32
    %c0_i32_3 = arith.constant 0 : i32
    return %c0_i32, %c0_i32_0, %c0_i32_1, %c0_i32_2 : i32, i32, i32, i32
  }
  func.func @transform_3(%arg0: i32, %arg1: i32) -> (i32, i32) {
    %c0_i32 = arith.constant 0 : i32
    %c0_i32_0 = arith.constant 0 : i32
    %c0_i32_1 = arith.constant 0 : i32
    return %c0_i32, %c0_i32_0 : i32, i32
  }
  func.func @transform_4(%arg0: i32, %arg1: i32) -> (i32, i32, i32, i32) {
    %c0_i32 = arith.constant 0 : i32
    %c0_i32_0 = arith.constant 0 : i32
    %c0_i32_1 = arith.constant 0 : i32
    return %arg0, %arg1, %c0_i32, %c0_i32_0 : i32, i32, i32, i32
  }
}

</mosaic_0001>

<llo_original>
// kernel: tpu_custom_call.1
$region0: #{tpu_custom_call.1}
  #allocation0 [shape = 'u32[]', space=smem, size = 0x4, offset = 0x4, fixed_abs, tag = 'smem constant byte address 0x4 - core index']
  #allocation1 [shape = 'u32[144,128]{1,0:T(1,128)}', space=vmem, size = 0x12000, scoped, tag = 'internal scratch']
  %s0 = inlined_call_operand.vmem [shape: bf16[2,17,17,12], index: 0, kind: input, shape index: {}]
  %s1 = inlined_call_operand.vmem [shape: bf16[2,17,17,12], index: 1, kind: input, shape index: {}]
  %s2 = inlined_call_operand.vmem [shape: bf16[2,2,12,32], index: 2, kind: input, shape index: {}]
  %s3 = inlined_call_operand.vmem [shape: f32[1,32], index: 3, kind: input, shape index: {}]
  %s4 = inlined_call_operand.hbm [shape: bf16[2,16,16,32], index: 4, kind: output, shape index: {}]
  %s5 = sld [smem:[#allocation0]]
  $region49: #{tpu_custom_call.1} parent=0
    _
  %s7 = ssub.s32 1, %s5
  %s8 = scalar_select 0, %s7, %s5
  $region1: #{tpu_custom_call.1} parent=0
    #allocation2 [shape = 'u8[8192]{0}', space=vmem, size = 0x2000, scoped, tag = 'output window, operand 0']
    #allocation3 [shape = 's32[2]{0}', space=sflag, size = 0x8, scoped, tag = 'scoped memory for tpu_custom_call.1']
    %9 = vsyncpa [#allocation3], 0
    %s10 = scalar_lea.sflag [#allocation3], 1
    %11 = vsyncpa %s10, 0
    loop: start=0, step=1, limit=34
    $region2: #{tpu_custom_call.1} parent=1 // loop_pre_header
      _
    $region3: #{tpu_custom_call.1} parent=1 // loop_header
      %s13 = sphi 0, %s17
      %p14 = scmp.ge.s32.totalorder %s13, 34
      %s20 = sphi 0, %s32
      %s21 = sphi 0, %s28
      %s22 = sphi 0, %s20
      %s23 = sphi 0, %s21
      %s24 = sphi 0, %s22
      %s25 = sphi 0, %s23
      %s37 = sphi 0, %s39
      %s40 = sphi 0, %s37
      %s41 = sphi 0, %s40
      %s57 = sphi 0, %s41
      %s67 = sphi 0, %s69
      %s70 = sphi 0, %s67
      %s71 = sphi 0, %s70
      %s87 = sphi 0, %s71
      %s91 = sphi 0, %s91
      %s93 = sphi 0, %s91
      %s94 = sphi 0, %s93
      %s108 = sphi 0, %s94
      %s112 = sphi 0, %s112
      %s114 = sphi 0, %s112
      %s115 = sphi 0, %s114
      %s129 = sphi 0, %s115
      %s137 = sphi 0, %s139
      %s140 = sphi 0, %s137
      %s141 = sphi 0, %s140
      %s157 = sphi 0, %s141
    $region4: #{tpu_custom_call.1} parent=1 // loop_header_branch
      %16 = sbr.rel (%p14) target = $region8
    $region5: #{tpu_custom_call.1} parent=1 // loop_body
      %s18 = ssub.s32 %s13, 1
      %s19 = ssub.s32 %s13, 2
      %s26 = sadd.s32 1, %s21
      %p27 = scmp.ge.s32.totalorder %s26, 16
      %s28 = scalar_select %p27, 0, %s26
      %s29 = sadd.s32 1, %s20
      %s30 = scalar_select %p27, %s29, %s20
      %p31 = scmp.ge.s32.totalorder %s30, 2
      %s32 = scalar_select %p31, 0, %s30
      %s33 = ssub.s32 %s20, %s32
      %s34 = ssub.s32 %s21, %s28
      %s35 = sor.u32 %s33, %s34
      %p36 = scmp.eq.s32.totalorder %s35, 0
      %s38 = sadd.s32 %s37, 1
      %s39 = scalar_select %p36, %s37, %s38
      %p42 = pneg %p36
      %p43 = scmp.eq.s32.totalorder %s13, 31
      %p44 = por %p42, %p43
      %p45 = scmp.ne.s32.totalorder %s37, %s40
      %p46 = scmp.eq.s32.totalorder %s13, 0
      %p47 = por %p45, %p46
      %p48 = scmp.ne.s32.totalorder %s37, %s40
      %p49 = scmp.eq.s32.totalorder %s18, 31
      %p50 = por %p48, %p49
      %p51 = scmp.ne.s32.totalorder %s40, %s41
      %p52 = scmp.eq.s32.totalorder %s18, 0
      %p53 = por %p51, %p52
      %p54 = scmp.ne.s32.totalorder %s40, %s41
      %p55 = scmp.eq.s32.totalorder %s19, 31
      %p56 = por %p54, %p55
      %p58 = scmp.ne.s32.totalorder %s41, %s57
      %p59 = scmp.eq.s32.totalorder %s19, 0
      %p60 = por %p58, %p59
      %s61 = sadd.s32 %s21, 1
      %s62 = sadd.s32 %s28, 1
      %s63 = ssub.s32 %s20, %s32
      %s64 = ssub.s32 %s61, %s62
      %s65 = sor.u32 %s63, %s64
      %p66 = scmp.eq.s32.totalorder %s65, 0
      %s68 = sadd.s32 %s67, 1
      %s69 = scalar_select %p66, %s67, %s68
      %p72 = pneg %p66
      %p73 = scmp.eq.s32.totalorder %s13, 31
      %p74 = por %p72, %p73
      %p75 = scmp.ne.s32.totalorder %s67, %s70
      %p76 = scmp.eq.s32.totalorder %s13, 0
      %p77 = por %p75, %p76
      %p78 = scmp.ne.s32.totalorder %s67, %s70
      %p79 = scmp.eq.s32.totalorder %s18, 31
      %p80 = por %p78, %p79
      %p81 = scmp.ne.s32.totalorder %s70, %s71
      %p82 = scmp.eq.s32.totalorder %s18, 0
      %p83 = por %p81, %p82
      %p84 = scmp.ne.s32.totalorder %s70, %s71
      %p85 = scmp.eq.s32.totalorder %s19, 31
      %p86 = por %p84, %p85
      %p88 = scmp.ne.s32.totalorder %s71, %s87
      %p89 = scmp.eq.s32.totalorder %s19, 0
      %p90 = por %p88, %p89
      %s92 = sadd.s32 %s91, 1
      %p95 = scmp.eq.s32.totalorder %s13, 31
      %p96 = scmp.ne.s32.totalorder %s91, %s93
      %p97 = scmp.eq.s32.totalorder %s13, 0
      %p98 = por %p96, %p97
      %p99 = scmp.ne.s32.totalorder %s91, %s93
      %p100 = scmp.eq.s32.totalorder %s18, 31
      %p101 = por %p99, %p100
      %p102 = scmp.ne.s32.totalorder %s93, %s94
      %p103 = scmp.eq.s32.totalorder %s18, 0
      %p104 = por %p102, %p103
      %p105 = scmp.ne.s32.totalorder %s93, %s94
      %p106 = scmp.eq.s32.totalorder %s19, 31
      %p107 = por %p105, %p106
      %p109 = scmp.ne.s32.totalorder %s94, %s108
      %p110 = scmp.eq.s32.totalorder %s19, 0
      %p111 = por %p109, %p110
      %s113 = sadd.s32 %s112, 1
      %p116 = scmp.eq.s32.totalorder %s13, 31
      %p117 = scmp.ne.s32.totalorder %s112, %s114
      %p118 = scmp.eq.s32.totalorder %s13, 0
      %p119 = por %p117, %p118
      %p120 = scmp.ne.s32.totalorder %s112, %s114
      %p121 = scmp.eq.s32.totalorder %s18, 31
      %p122 = por %p120, %p121
      %p123 = scmp.ne.s32.totalorder %s114, %s115
      %p124 = scmp.eq.s32.totalorder %s18, 0
      %p125 = por %p123, %p124
      %p126 = scmp.ne.s32.totalorder %s114, %s115
      %p127 = scmp.eq.s32.totalorder %s19, 31
      %p128 = por %p126, %p127
      %p130 = scmp.ne.s32.totalorder %s115, %s129
      %p131 = scmp.eq.s32.totalorder %s19, 0
      %p132 = por %p130, %p131
      %s133 = ssub.s32 %s20, %s32
      %s134 = ssub.s32 %s21, %s28
      %s135 = sor.u32 %s133, %s134
      %p136 = scmp.eq.s32.totalorder %s135, 0
      %s138 = sadd.s32 %s137, 1
      %s139 = scalar_select %p136, %s137, %s138
      %p142 = pneg %p136
      %p143 = scmp.eq.s32.totalorder %s13, 31
      %p144 = por %p142, %p143
      %p145 = scmp.ne.s32.totalorder %s137, %s140
      %p146 = scmp.eq.s32.totalorder %s13, 0
      %p147 = por %p145, %p146
      %p148 = scmp.ne.s32.totalorder %s137, %s140
      %p149 = scmp.eq.s32.totalorder %s18, 31
      %p150 = por %p148, %p149
      %p151 = scmp.ne.s32.totalorder %s140, %s141
      %p152 = scmp.eq.s32.totalorder %s18, 0
      %p153 = por %p151, %p152
      %p154 = scmp.ne.s32.totalorder %s140, %s141
      %p155 = scmp.eq.s32.totalorder %s19, 31
      %p156 = por %p154, %p155
      %p158 = scmp.ne.s32.totalorder %s141, %s157
      %p159 = scmp.eq.s32.totalorder %s19, 0
      %p160 = por %p158, %p159
      %p161 = scmp.le.s32.totalorder 1, %s13
      %p162 = scmp.lt.s32.totalorder %s13, 33
      %p163 = pnand %p161, %p162
      %p164 = pneg %p163
      // Predicated region
      $region9: #{tpu_custom_call.1} parent=5 // pred_check
        _
      $region10: #{tpu_custom_call.1} parent=5 // pred_check_branch
        %166 = sbr.rel (%p163) target = $region12
      $region11: #{tpu_custom_call.1} parent=5 // pred_region
        %s167 = ssub.s32 %s13, 1
        // Predicated region
        $region13: #{tpu_custom_call.1} parent=11 // pred_check
          %p168 = pneg %p104
        $region14: #{tpu_custom_call.1} parent=11 // pred_check_branch
          %170 = sbr.rel (%p168) target = $region16
        $region15: #{tpu_custom_call.1} parent=11 // pred_region
          _
        $region16: #{tpu_custom_call.1} parent=11 // pred_fallthru
          _
        // Predicated region
        $region17: #{tpu_custom_call.1} parent=11 // pred_check
          %p171 = pneg %p125
        $region18: #{tpu_custom_call.1} parent=11 // pred_check_branch
          %173 = sbr.rel (%p171) target = $region20
        $region19: #{tpu_custom_call.1} parent=11 // pred_region
          _
        $region20: #{tpu_custom_call.1} parent=11 // pred_fallthru
          _
      $region12: #{tpu_custom_call.1} parent=5 // pred_fallthru
        _
      %p174 = scmp.lt.s32.totalorder %s13, 32
      // Predicated region
      $region21: #{tpu_custom_call.1} parent=5 // pred_check
        %p175 = pneg %p174
      $region22: #{tpu_custom_call.1} parent=5 // pred_check_branch
        %177 = sbr.rel (%p175) target = $region24
      $region23: #{tpu_custom_call.1} parent=5 // pred_region
        // Predicated region
        $region25: #{tpu_custom_call.1} parent=23 // pred_check
          %p178 = pneg %p47
        $region26: #{tpu_custom_call.1} parent=23 // pred_check_branch
          %180 = sbr.rel (%p178) target = $region28
        $region27: #{tpu_custom_call.1} parent=23 // pred_region
          %p181 = scmp.lt.s32.totalorder %s20, 1
          %s182 = scalar_select %p181, %s20, 1
          %p183 = scmp.lt.s32.totalorder %s21, 16
          %s184 = scalar_select %p183, %s21, 16
          %s185 = smul.addr %s184, 3
          %s186 = smul.addr %s182, 51
          %s187 = sadd.s32 %s185, %s186
          %s188 = smul.addr %s187, 4
          %s189 = scalar_lea.vmem %s0, %s188
        $region28: #{tpu_custom_call.1} parent=23 // pred_fallthru
          _
        // Predicated region
        $region29: #{tpu_custom_call.1} parent=23 // pred_check
          %p190 = pneg %p77
        $region30: #{tpu_custom_call.1} parent=23 // pred_check_branch
          %192 = sbr.rel (%p190) target = $region32
        $region31: #{tpu_custom_call.1} parent=23 // pred_region
          %s193 = sadd.s32 %s21, 1
          %p194 = scmp.lt.s32.totalorder %s20, 1
          %s195 = scalar_select %p194, %s20, 1
          %p196 = scmp.lt.s32.totalorder %s193, 16
          %s197 = scalar_select %p196, %s193, 16
          %s198 = smul.addr %s197, 3
          %s199 = smul.addr %s195, 51
          %s200 = sadd.s32 %s198, %s199
          %s201 = smul.addr %s200, 4
          %s202 = scalar_lea.vmem %s1, %s201
          %s203 = sadd.s32 %s21, 1
        $region32: #{tpu_custom_call.1} parent=23 // pred_fallthru
          _
      $region24: #{tpu_custom_call.1} parent=5 // pred_fallthru
        _
      %p204 = scmp.le.s32.totalorder 1, %s13
      %p205 = scmp.lt.s32.totalorder %s13, 33
      %p206 = pnand %p204, %p205
      %p207 = pneg %p206
      // Predicated region
      $region33: #{tpu_custom_call.1} parent=5 // pred_check
        _
      $region34: #{tpu_custom_call.1} parent=5 // pred_check_branch
        %209 = sbr.rel (%p206) target = $region36
      $region35: #{tpu_custom_call.1} parent=5 // pred_region
        %s210 = ssub.s32 %s13, 1
        %p211 = scmp.lt.s32.totalorder %s22, 1
        %s212 = scalar_select %p211, %s22, 1
        %p213 = scmp.lt.s32.totalorder %s23, 16
        %s214 = scalar_select %p213, %s23, 16
        %s215 = smul.addr %s214, 3
        %s216 = smul.addr %s212, 51
        %s217 = sadd.s32 %s215, %s216
        %s218 = smul.addr %s217, 4
        %s219 = scalar_lea.vmem %s0, %s218
        %p220 = pneg %p53
        %p221 = pneg %p50
        %s222 = sadd.s32 %s23, 1
        %p223 = scmp.lt.s32.totalorder %s22, 1
        %s224 = scalar_select %p223, %s22, 1
        %p225 = scmp.lt.s32.totalorder %s222, 16
        %s226 = scalar_select %p225, %s222, 16
        %s227 = smul.addr %s226, 3
        %s228 = smul.addr %s224, 51
        %s229 = sadd.s32 %s227, %s228
        %s230 = smul.addr %s229, 4
        %s231 = scalar_lea.vmem %s1, %s230
        %p232 = pneg %p83
        %p233 = pneg %p80
        %p234 = pneg %p104
        %p235 = pneg %p101
        %p236 = pneg %p125
        %p237 = pneg %p122
        %p238 = pneg %p153
        %p239 = pneg %p150
        %s240 = sand.u32 %s140, 1
        %s241 = scalar_lea.sflag [#allocation3], %s240
        %s242 = sand.u32 %s140, 1
        %s243 = smul.addr %s242, 8
        %s244 = scalar_lea.vmem [#allocation2], %s243
        %p245 = scmp.lt.s32.totalorder %s22, 1
        %s246 = scalar_select %p245, %s22, 1
        %p247 = scmp.lt.s32.totalorder %s23, 16
        %s248 = scalar_select %p247, %s23, 16
        %s249 = smul.addr %s248, 3
        %s250 = smul.addr %s246, 51
        %s251 = sadd.s32 %s249, %s250
        %s252 = smul.addr %s251, 4
        %s253 = scalar_lea.vmem %s0, %s252
        %s254 = sadd.s32 %s23, 1
        %p255 = scmp.lt.s32.totalorder %s22, 1
        %s256 = scalar_select %p255, %s22, 1
        %p257 = scmp.lt.s32.totalorder %s254, 16
        %s258 = scalar_select %p257, %s254, 16
        %s259 = smul.addr %s258, 3
        %s260 = smul.addr %s256, 51
        %s261 = sadd.s32 %s259, %s260
        %s262 = smul.addr %s261, 4
        %s263 = scalar_lea.vmem %s1, %s262
        %s264 = sadd.s32 %s23, 1
        %v266 = vld [vmem:[%s253] sm:$0xf]
        %v267 = vld [vmem:[%s253 + $0x4] sm:$0xf]
        %v268 = vld [vmem:[%s2] sm:$0xf]
        %v269 = vld [vmem:[%s2 + $0x4] sm:$0x3]
        %v270 = vld [vmem:[%s253 + $0x8] sm:$0x1]
        %s271 = scalar_lea.vmem %s2, 8
        %v272 = vld [vmem:[%s271] sm:$0xf]
        %v273 = vld [vmem:[%s271 + $0x4] sm:$0x3]
        %v277 = vunpack.c.l.b16 %v266
        %v278 = vunpack.c.l.b16 %v267
        %v279 = vunpack.c.l.b16 %v270
        %v280 = vpack.c.b16 %v278, %v277
        %v281 = vpack.c.b16 %v279, %v279
        %vm282 = vsmask.f32 7424
        %v284 = vshrl.u32 %v280, 16
        %v286 = vshll.u32 %v280, 16
        %v288 = vrot.slane %v286, 1
        %v289 = vor.u32 %v284, %v288
        %v291 = vshll.u32 %v281, 16
        %v293 = vrot.slane %v291, 1
        %v294 = vsel %vm282, %v289, %v293
        %v297 = vunpack.c.l.b16 %v272
        %v298 = vunpack.c.l.b16 %v273
        %v299 = vpack.c.b16 %v298, %v297
        %vm300 = vcmask 97280
        %v302 = vsel %vm300, %v294, 0
        %vm304 = vcmask 1045504
        %v306 = vsel %vm304, %v299, 0
        %308 = vmatprep.subr.bf16.mxu0 0
        %309 = vmatpush1.bf16.msra.mxu0 %v306
        %310 = vmatprep.subr.bf16.mxu0 0
        %311 = vmatpush1.bf16.msra.mxu0 0
        %312 = vmatprep.subr.bf16.mxu0 0
        %313 = vmatpush1.bf16.msra.mxu0 0
        %314 = vmatprep.subr.bf16.mxu0 0
        %315 = vmatpush1.bf16.msra.mxu0 0
        %316 = vmatprep.subr.bf16.mxu0 0
        %317 = vmatpush1.bf16.msra.mxu0 0
        %318 = vmatprep.subr.bf16.mxu0 0
        %319 = vmatpush1.bf16.msra.mxu0 0
        %320 = vmatprep.subr.bf16.mxu0 0
        %321 = vmatpush1.bf16.msra.mxu0 0
        %322 = vmatprep.subr.bf16.mxu0 0
        %323 = vmatpush1.bf16.msra.mxu0 0
        %324 = vmatprep.subr.bf16.mxu0 0
        %325 = vmatpush1.bf16.msra.mxu0 0
        %326 = vmatprep.subr.bf16.mxu0 0
        %327 = vmatpush1.bf16.msra.mxu0 0
        %328 = vmatprep.subr.bf16.mxu0 0
        %329 = vmatpush1.bf16.msra.mxu0 0
        %330 = vmatprep.subr.bf16.mxu0 0
        %331 = vmatpush1.bf16.msra.mxu0 0
        %332 = vmatprep.subr.bf16.mxu0 0
        %333 = vmatpush1.bf16.msra.mxu0 0
        %334 = vmatprep.subr.bf16.mxu0 0
        %335 = vmatpush1.bf16.msra.mxu0 0
        %336 = vmatprep.subr.bf16.mxu0 0
        %337 = vmatpush1.bf16.msra.mxu0 0
        %338 = vmatprep.subr.bf16.mxu0 0
        %339 = vmatpush1.bf16.msra.mxu0 0
        %340 = vmatprep.mubr.bf16.mxu0 0
        %341 = vmatmul.mubr.bf16.gmra.mrb[0].mxu0 %v302
        %v342 = vpop.f32.mrb[0].mxu0
        %v343 = vadd.f32 0.0, %v342
        %v344 = vpop.f32.mrb[0].mxu0
        %v345 = vpop.f32.mrb[0].mxu0
        %v346 = vadd.f32 0.0, %v345
        %v347 = vpop.f32.mrb[0].mxu0
        %348 = vdwg.mxu0
        %v351 = vunpack.c.l.b16 %v268
        %v352 = vunpack.c.l.b16 %v269
        %v353 = vpack.c.b16 %v352, %v351
        %v354 = vsel %vm300, %v280, 0
        %v357 = vsel %vm304, %v353, 0
        %359 = vmatprep.subr.bf16.mxu0 0
        %360 = vmatpush1.bf16.msra.mxu0 %v357
        %361 = vmatprep.subr.bf16.mxu0 0
        %362 = vmatpush1.bf16.msra.mxu0 0
        %363 = vmatprep.subr.bf16.mxu0 0
        %364 = vmatpush1.bf16.msra.mxu0 0
        %365 = vmatprep.subr.bf16.mxu0 0
        %366 = vmatpush1.bf16.msra.mxu0 0
        %367 = vmatprep.subr.bf16.mxu0 0
        %368 = vmatpush1.bf16.msra.mxu0 0
        %369 = vmatprep.subr.bf16.mxu0 0
        %370 = vmatpush1.bf16.msra.mxu0 0
        %371 = vmatprep.subr.bf16.mxu0 0
        %372 = vmatpush1.bf16.msra.mxu0 0
        %373 = vmatprep.subr.bf16.mxu0 0
        %374 = vmatpush1.bf16.msra.mxu0 0
        %375 = vmatprep.subr.bf16.mxu0 0
        %376 = vmatpush1.bf16.msra.mxu0 0
        %377 = vmatprep.subr.bf16.mxu0 0
        %378 = vmatpush1.bf16.msra.mxu0 0
        %379 = vmatprep.subr.bf16.mxu0 0
        %380 = vmatpush1.bf16.msra.mxu0 0
        %381 = vmatprep.subr.bf16.mxu0 0
        %382 = vmatpush1.bf16.msra.mxu0 0
        %383 = vmatprep.subr.bf16.mxu0 0
        %384 = vmatpush1.bf16.msra.mxu0 0
        %385 = vmatprep.subr.bf16.mxu0 0
        %386 = vmatpush1.bf16.msra.mxu0 0
        %387 = vmatprep.subr.bf16.mxu0 0
        %388 = vmatpush1.bf16.msra.mxu0 0
        %389 = vmatprep.subr.bf16.mxu0 0
        %390 = vmatpush1.bf16.msra.mxu0 0
        %391 = vmatprep.mubr.bf16.mxu0 0
        %392 = vmatmul.mubr.bf16.gmra.mrb[0].mxu0 %v354
        %v393 = vpop.f32.mrb[0].mxu0
        %v394 = vadd.f32 %v343, %v393
        %v395 = vpop.f32.mrb[0].mxu0
        %v396 = vpop.f32.mrb[0].mxu0
        %v397 = vadd.f32 %v346, %v396
        %v398 = vpop.f32.mrb[0].mxu0
        %399 = vdwg.mxu0
        %v400 = vld [vmem:[%s263] sm:$0xf]
        %v401 = vld [vmem:[%s263 + $0x4] sm:$0xf]
        %s402 = scalar_lea.vmem %s2, 16
        %v403 = vld [vmem:[%s402] sm:$0xf]
        %v404 = vld [vmem:[%s402 + $0x4] sm:$0x3]
        %v407 = vunpack.c.l.b16 %v400
        %v408 = vunpack.c.l.b16 %v401
        %v409 = vpack.c.b16 %v408, %v407
        %v412 = vunpack.c.l.b16 %v403
        %v413 = vunpack.c.l.b16 %v404
        %v414 = vpack.c.b16 %v413, %v412
        %v416 = vsel %vm300, %v409, 0
        %v419 = vsel %vm304, %v414, 0
        %421 = vmatprep.subr.bf16.mxu0 0
        %422 = vmatpush1.bf16.msra.mxu0 %v419
        %423 = vmatprep.subr.bf16.mxu0 0
        %424 = vmatpush1.bf16.msra.mxu0 0
        %425 = vmatprep.subr.bf16.mxu0 0
        %426 = vmatpush1.bf16.msra.mxu0 0
        %427 = vmatprep.subr.bf16.mxu0 0
        %428 = vmatpush1.bf16.msra.mxu0 0
        %429 = vmatprep.subr.bf16.mxu0 0
        %430 = vmatpush1.bf16.msra.mxu0 0
        %431 = vmatprep.subr.bf16.mxu0 0
        %432 = vmatpush1.bf16.msra.mxu0 0
        %433 = vmatprep.subr.bf16.mxu0 0
        %434 = vmatpush1.bf16.msra.mxu0 0
        %435 = vmatprep.subr.bf16.mxu0 0
        %436 = vmatpush1.bf16.msra.mxu0 0
        %437 = vmatprep.subr.bf16.mxu0 0
        %438 = vmatpush1.bf16.msra.mxu0 0
        %439 = vmatprep.subr.bf16.mxu0 0
        %440 = vmatpush1.bf16.msra.mxu0 0
        %441 = vmatprep.subr.bf16.mxu0 0
        %442 = vmatpush1.bf16.msra.mxu0 0
        %443 = vmatprep.subr.bf16.mxu0 0
        %444 = vmatpush1.bf16.msra.mxu0 0
        %445 = vmatprep.subr.bf16.mxu0 0
        %446 = vmatpush1.bf16.msra.mxu0 0
        %447 = vmatprep.subr.bf16.mxu0 0
        %448 = vmatpush1.bf16.msra.mxu0 0
        %449 = vmatprep.subr.bf16.mxu0 0
        %450 = vmatpush1.bf16.msra.mxu0 0
        %451 = vmatprep.subr.bf16.mxu0 0
        %452 = vmatpush1.bf16.msra.mxu0 0
        %453 = vmatprep.mubr.bf16.mxu0 0
        %454 = vmatmul.mubr.bf16.gmra.mrb[0].mxu0 %v416
        %v455 = vpop.f32.mrb[0].mxu0
        %v456 = vadd.f32 0.0, %v455
        %v457 = vpop.f32.mrb[0].mxu0
        %v458 = vpop.f32.mrb[0].mxu0
        %v459 = vadd.f32 0.0, %v458
        %v460 = vpop.f32.mrb[0].mxu0
        %461 = vdwg.mxu0
        %v462 = vadd.f32 %v394, %v456
        %v463 = vadd.f32 %v397, %v459
        %v464 = vld [vmem:[%s263] sm:$0xf]
        %v465 = vld [vmem:[%s263 + $0x4] sm:$0xf]
        %v466 = vld [vmem:[%s263 + $0x8] sm:$0x1]
        %s467 = scalar_lea.vmem %s2, 24
        %v468 = vld [vmem:[%s467] sm:$0xf]
        %v469 = vld [vmem:[%s467 + $0x4] sm:$0x3]
        %v473 = vunpack.c.l.b16 %v464
        %v474 = vunpack.c.l.b16 %v465
        %v475 = vunpack.c.l.b16 %v466
        %v476 = vpack.c.b16 %v474, %v473
        %v477 = vpack.c.b16 %v475, %v475
        %v479 = vshrl.u32 %v476, 16
        %v481 = vshll.u32 %v476, 16
        %v483 = vrot.slane %v481, 1
        %v484 = vor.u32 %v479, %v483
        %v486 = vshll.u32 %v477, 16
        %v488 = vrot.slane %v486, 1
        %v489 = vsel %vm282, %v484, %v488
        %v492 = vunpack.c.l.b16 %v468
        %v493 = vunpack.c.l.b16 %v469
        %v494 = vpack.c.b16 %v493, %v492
        %v496 = vsel %vm300, %v489, 0
        %v499 = vsel %vm304, %v494, 0
        %501 = vmatprep.subr.bf16.mxu0 0
        %502 = vmatpush1.bf16.msra.mxu0 %v499
        %503 = vmatprep.subr.bf16.mxu0 0
        %504 = vmatpush1.bf16.msra.mxu0 0
        %505 = vmatprep.subr.bf16.mxu0 0
        %506 = vmatpush1.bf16.msra.mxu0 0
        %507 = vmatprep.subr.bf16.mxu0 0
        %508 = vmatpush1.bf16.msra.mxu0 0
        %509 = vmatprep.subr.bf16.mxu0 0
        %510 = vmatpush1.bf16.msra.mxu0 0
        %511 = vmatprep.subr.bf16.mxu0 0
        %512 = vmatpush1.bf16.msra.mxu0 0
        %513 = vmatprep.subr.bf16.mxu0 0
        %514 = vmatpush1.bf16.msra.mxu0 0
        %515 = vmatprep.subr.bf16.mxu0 0
        %516 = vmatpush1.bf16.msra.mxu0 0
        %517 = vmatprep.subr.bf16.mxu0 0
        %518 = vmatpush1.bf16.msra.mxu0 0
        %519 = vmatprep.subr.bf16.mxu0 0
        %520 = vmatpush1.bf16.msra.mxu0 0
        %521 = vmatprep.subr.bf16.mxu0 0
        %522 = vmatpush1.bf16.msra.mxu0 0
        %523 = vmatprep.subr.bf16.mxu0 0
        %524 = vmatpush1.bf16.msra.mxu0 0
        %525 = vmatprep.subr.bf16.mxu0 0
        %526 = vmatpush1.bf16.msra.mxu0 0
        %527 = vmatprep.subr.bf16.mxu0 0
        %528 = vmatpush1.bf16.msra.mxu0 0
        %529 = vmatprep.subr.bf16.mxu0 0
        %530 = vmatpush1.bf16.msra.mxu0 0
        %531 = vmatprep.subr.bf16.mxu0 0
        %532 = vmatpush1.bf16.msra.mxu0 0
        %533 = vmatprep.mubr.bf16.mxu0 0
        %534 = vmatmul.mubr.bf16.gmra.mrb[0].mxu0 %v496
        %v535 = vpop.f32.mrb[0].mxu0
        %v536 = vadd.f32 0.0, %v535
        %v537 = vpop.f32.mrb[0].mxu0
        %v538 = vpop.f32.mrb[0].mxu0
        %v539 = vadd.f32 0.0, %v538
        %v540 = vpop.f32.mrb[0].mxu0
        %541 = vdwg.mxu0
        %v542 = vadd.f32 %v462, %v536
        %v543 = vadd.f32 %v463, %v539
        %v544 = vld [vmem:[%s3] sm:$0x1]
        %v546 = vlaneseq
        %v547 = vshrl.u32 %v546, 7
        %v548 = vsub.s32 0, %v547
        %v549 = vrot.slane %v544, %v548
        %v551 = vadd.f32 %v542, %v549
        %v552 = vadd.f32 %v543, %v549
        %v553 = vxor.u32 %v551, 2147483648
        %v554 = vxor.u32 %v552, 2147483648
        %v555 = vmul.f32 %v553, 1.442695
        %v556 = vpow.pop %v555
        %v557 = vmul.f32 %v554, 1.442695
        %v558 = vpow.pop %v557
        %v559 = vadd.f32 %v556, 1.0
        %v560 = vadd.f32 %v558, 1.0
        %v561 = vrcp.pop %v559
        %v562 = vmul.f32 1.0, %v561
        %v563 = vrcp.pop %v560
        %v564 = vmul.f32 1.0, %v563
        %v565 = vmul.f32 %v551, %v562
        %v566 = vmul.f32 %v552, %v564
        %v567 = vpack.c.bf16 %v566, %v565
        %v569 = vunpack.c.l.b16 %v567
        %v570 = vunpack.c.h.b16 %v567
        %v571 = vpack.c.b16 %v569, %v569
        %v572 = vpack.c.b16 %v570, %v570
        %vm575 = vcmask 257024
        %576 = vst.msk [vmem:[%s244] sm:$0xf] %vm575, %v571
        %577 = vst.msk [vmem:[%s244 + $0x4] sm:$0xf] %vm575, %v572
        %s578 = sand.u32 %s140, 1
        %s579 = scalar_lea.sflag [#allocation3], %s578
        %s580 = sand.u32 %s140, 1
        %s581 = smul.addr %s580, 8
        %s582 = scalar_lea.vmem [#allocation2], %s581
        // Predicated region
        $region37: #{tpu_custom_call.1} parent=35 // pred_check
          %p583 = pneg %p150
        $region38: #{tpu_custom_call.1} parent=35 // pred_check_branch
          %585 = sbr.rel (%p583) target = $region40
        $region39: #{tpu_custom_call.1} parent=35 // pred_region
          %s587 = ssub.s32 128, 128
          %588 = vsyncadd %s579, %s587
          %s589 = smul.addr %s23, 2
          %s590 = smul.addr %s22, 32
          %s591 = sadd.s32 %s589, %s590
          %s592 = smul.addr %s591, 64
          %s593 = scalar_lea.hbm %s4, %s592
          %s594 = sshll.u32 %s582, 4
          %s595 = int_to_ptr.vmem [resolvable:$true] %s594
          %600 = dma.vmem_to_hbm [thread:$0]  %s595, 128, %s593, %s579, 64, 64, 4
        $region40: #{tpu_custom_call.1} parent=35 // pred_fallthru
          _
      $region36: #{tpu_custom_call.1} parent=5 // pred_fallthru
        _
      %p601 = scmp.le.s32.totalorder 2, %s13
      // Predicated region
      $region41: #{tpu_custom_call.1} parent=5 // pred_check
        %p602 = pneg %p601
      $region42: #{tpu_custom_call.1} parent=5 // pred_check_branch
        %604 = sbr.rel (%p602) target = $region44
      $region43: #{tpu_custom_call.1} parent=5 // pred_region
        %s605 = ssub.s32 %s13, 2
        // Predicated region
        $region45: #{tpu_custom_call.1} parent=43 // pred_check
          %p606 = pneg %p156
        $region46: #{tpu_custom_call.1} parent=43 // pred_check_branch
          %608 = sbr.rel (%p606) target = $region48
        $region47: #{tpu_custom_call.1} parent=43 // pred_region
          %s609 = sand.u32 %s141, 1
          %s610 = scalar_lea.sflag [#allocation3], %s609
          %s611 = sand.u32 %s141, 1
          %s612 = smul.addr %s611, 8
          %s613 = scalar_lea.vmem [#allocation2], %s612
          %614 = dma.done %s610, 128
        $region48: #{tpu_custom_call.1} parent=43 // pred_fallthru
          _
      $region44: #{tpu_custom_call.1} parent=5 // pred_fallthru
        _
    $region6: #{tpu_custom_call.1} parent=1 // loop_footer
      %s17 = sadd.s32 1, %s13
    $region7: #{tpu_custom_call.1} parent=1 // loop_footer_branch
      %12 = sbr.rel target = $region3
    $region8: #{tpu_custom_call.1} parent=1 // loop_exit
      _
    %615 = vsyncpa [#allocation3], 1
    %s616 = scalar_lea.sflag [#allocation3], 1
    %617 = vsyncpa %s616, 1

</llo_original>
